<compile_context>
chip_gen: v7x
topology: tpu7x:2x2x1
jax: 0.10.0
libtpu: 0.0.40
codegen_flags: <defaults>
</compile_context>

<pallas_src>
import jax
import jax.numpy as jnp
from jax.experimental import pallas as pl
from jax.experimental.pallas import tpu as pltpu

HID1 = 32   # hidden_dim1
HID2 = 32   # hidden_dim2


# ----------------------------- fused Pallas kernel ------------------------------

def _dual_gcn_fused_kernel(adj_m_ref, x_m_ref, adj_p_ref, x_p_ref,
                           w1_ref, b1_ref, w2_ref, b2_ref,
                           fcw_m_ref, fcw_p_ref, fcw_e_ref, fcb_ref,
                           energy_ref, out_ref):
    w1 = w1_ref[...]          # (1, HID1)
    b1 = b1_ref[...]          # (1, HID1)
    w2 = w2_ref[...]          # (HID1, HID2)
    b2 = b2_ref[...]          # (1, HID2)

    def gcn_branch_pool(adj, x):
        # Layer 1 — single input feature: matvec first, then VPU broadcast-multiply.
        ax = jnp.dot(adj, x, preferred_element_type=jnp.float32)            # (N, 1)
        h1 = jnp.maximum(ax * w1 + b1, 0.0)                                 # (N, HID1)
        # Layer 2 — standard GCNConv: relu(A_hat @ (H1 @ W2) + b2).
        xw2 = jnp.dot(h1, w2, preferred_element_type=jnp.float32)           # (N, HID2)
        h2 = jnp.maximum(
            jnp.dot(adj, xw2, preferred_element_type=jnp.float32) + b2, 0.0)
        # global_add_pool with batch = zeros(N): sum over all nodes of the graph.
        return jnp.sum(h2, axis=0, keepdims=True)                           # (1, HID2)

    p_mol = gcn_branch_pool(adj_m_ref[...], x_m_ref[...])
    p_prot = gcn_branch_pool(adj_p_ref[...], x_p_ref[...])

    # Final Linear(2*HID2+1 -> 1): concat done implicitly by splitting the FC weight;
    # computed as VPU multiplies + lane reductions (no tiny 1xKx1 MXU matmul).
    e = energy_ref[0, 0]                                                    # SMEM scalar
    out_ref[...] = (jnp.sum(p_mol * fcw_m_ref[...], axis=-1, keepdims=True)
                    + jnp.sum(p_prot * fcw_p_ref[...], axis=-1, keepdims=True)
                    + e * fcw_e_ref[...]
                    + fcb_ref[...])


def _cost_estimate(n_m, n_p):
    def branch_flops(n):
        return (2 * n * n                  # A_hat @ x
                + 3 * n * HID1             # ax*W1 + b1, relu
                + 2 * n * HID1 * HID2      # H1 @ W2
                + 2 * n * n * HID2         # A_hat @ (H1 @ W2)
                + 2 * n * HID2             # + b2, relu
                + n * HID2)                # pool
    flops = branch_flops(n_m) + branch_flops(n_p) + 4 * (2 * HID2 + 1)
    bytes_accessed = 4 * (n_m * n_m + n_m + n_p * n_p + n_p
                          + 2 * HID1 + HID1 * HID2 + HID2
                          + (2 * HID2 + 1) + 2 + 1)
    return pl.CostEstimate(flops=flops, transcendentals=0,
                           bytes_accessed=bytes_accessed)


def dual_gcn_fused(adj_m, x_m, adj_p, x_p, w1, b1, w2, b2, fc_w, fc_b, phys_energy):
    """Single fused pallas_call: both GCN branches + pools + concat + FC."""
    # fc_w is in PyTorch nn.Linear layout (1, 2*HID2+1); split it lane-major so the
    # kernel can do the concat-free FC.
    fcw_m = fc_w[:, :HID2]
    fcw_p = fc_w[:, HID2:2 * HID2]
    fcw_e = fc_w[:, 2 * HID2:2 * HID2 + 1]

    vmem = pl.BlockSpec(memory_space=pltpu.MemorySpace.VMEM)
    smem = pl.BlockSpec(memory_space=pltpu.MemorySpace.SMEM)

    return pl.pallas_call(
        _dual_gcn_fused_kernel,
        out_shape=jax.ShapeDtypeStruct((1, 1), jnp.float32),
        in_specs=[vmem] * 12 + [smem],
        out_specs=vmem,
        cost_estimate=_cost_estimate(adj_m.shape[0], adj_p.shape[0]),
    )(adj_m, x_m, adj_p, x_p, w1, b1, w2, b2,
      fcw_m, fcw_p, fcw_e, fc_b, phys_energy.reshape(1, 1))


# ------------------------------- glue (JAX) --------------------------------

def normalized_adjacency(edge_index, num_nodes):
    """GCNConv normalization: A_hat = D^{-1/2} (A + I) D^{-1/2} (dense)."""
    src, dst = edge_index[0], edge_index[1]
    a = jnp.zeros((num_nodes, num_nodes), jnp.float32).at[dst, src].add(1.0)
    a = a + jnp.eye(num_nodes, dtype=jnp.float32)
    deg = jnp.sum(a, axis=1)
    dinv = jax.lax.rsqrt(deg)     # self-loops guarantee deg >= 1
    return dinv[:, None] * a * dinv[None, :]


def init_params(key):
    k1, k2, k3 = jax.random.split(key, 3)

    def glorot(k, shape):
        fan_in, fan_out = shape[0], shape[1]
        lim = jnp.sqrt(6.0 / (fan_in + fan_out))
        return jax.random.uniform(k, shape, jnp.float32, -lim, lim)

    fc_in = HID2 * 2 + 1
    lim_fc = 1.0 / jnp.sqrt(jnp.float32(fc_in))
    return {
        "w1": glorot(k1, (1, HID1)),                          # gcn1 weight
        "b1": jnp.zeros((1, HID1), jnp.float32),               # gcn1 bias
        "w2": glorot(k2, (HID1, HID2)),                        # gcn2 weight
        "b2": jnp.zeros((1, HID2), jnp.float32),               # gcn2 bias
        # nn.Linear(fc_in, 1) weight kept in PyTorch (out, in) = (1, 65) layout.
        "fc_w": jax.random.uniform(k3, (1, fc_in), jnp.float32, -lim_fc, lim_fc),
        "fc_b": jnp.zeros((1, 1), jnp.float32),
    }


@jax.jit
def dual_gcn_forward(params, mol_x, mol_edge_index, prot_x, prot_edge_index, phys_energy):
    adj_m = normalized_adjacency(mol_edge_index, mol_x.shape[0])
    adj_p = normalized_adjacency(prot_edge_index, prot_x.shape[0])
    # NOTE: self.drop (Dropout) is defined in __init__ but never applied in forward -> omitted.
    return dual_gcn_fused(adj_m, mol_x, adj_p, prot_x,
                          params["w1"], params["b1"], params["w2"], params["b2"],
                          params["fc_w"], params["fc_b"], phys_energy)      # (1, 1)


# ---------------------------------- main ------------------------------------

def _chain_edges(n):
    """Undirected chain graph 0-1-...-(n-1) as a (2, E) edge_index (both directions)."""
    src = list(range(n - 1)) + list(range(1, n))
    dst = list(range(1, n)) + list(range(n - 1))
    return jnp.array([src, dst], dtype=jnp.int32)


if __name__ == "__main__":
    key = jax.random.PRNGKey(0)
    kp, km, kq, ke = jax.random.split(key, 4)

    params = init_params(kp)

    n_mol, n_prot = 16, 24
    mol_x = jax.random.normal(km, (n_mol, 1), jnp.float32)        # mol_data.x
    prot_x = jax.random.normal(kq, (n_prot, 1), jnp.float32)      # prot_data.x
    mol_edge_index = _chain_edges(n_mol)                           # mol_data.edge_index
    prot_edge_index = _chain_edges(n_prot)                         # prot_data.edge_index
    phys_energy = jax.random.normal(ke, (1,), jnp.float32)         # scalar physics energy

    out = dual_gcn_forward(params, mol_x, mol_edge_index,
                           prot_x, prot_edge_index, phys_energy)
    out = jax.block_until_ready(out)
    assert out.shape == (1, 1) and out.dtype == jnp.float32
    print("KERNEL_OK")
</pallas_src>

<mosaic_0001>
module attributes {stable_mosaic.version = 11 : i64} {
  func.func @_dual_gcn_fused_kernel(%arg0: memref<16x16xf32, #tpu.memory_space<vmem>>, %arg1: memref<16x1xf32, #tpu.memory_space<vmem>>, %arg2: memref<24x24xf32, #tpu.memory_space<vmem>>, %arg3: memref<24x1xf32, #tpu.memory_space<vmem>>, %arg4: memref<1x32xf32, #tpu.memory_space<vmem>>, %arg5: memref<1x32xf32, #tpu.memory_space<vmem>>, %arg6: memref<32x32xf32, #tpu.memory_space<vmem>>, %arg7: memref<1x32xf32, #tpu.memory_space<vmem>>, %arg8: memref<1x32xf32, #tpu.memory_space<vmem>>, %arg9: memref<1x32xf32, #tpu.memory_space<vmem>>, %arg10: memref<1x1xf32, #tpu.memory_space<vmem>>, %arg11: memref<1x1xf32, #tpu.memory_space<vmem>>, %arg12: memref<1x1xf32, #tpu.memory_space<smem>>, %arg13: memref<1x1xf32, #tpu.memory_space<vmem>>) attributes {dimension_semantics = [], scalar_prefetch = 0 : i64, scratch_operands = 0 : i64, tpu.core_type = #tpu.core_type<tc>} {
    %c0 = arith.constant 0 : index
    %c0_0 = arith.constant 0 : index
    %0 = vector.load %arg4[%c0, %c0_0] : memref<1x32xf32, #tpu.memory_space<vmem>>, vector<1x32xf32>
    %c0_1 = arith.constant 0 : index
    %c0_2 = arith.constant 0 : index
    %1 = vector.load %arg5[%c0_1, %c0_2] : memref<1x32xf32, #tpu.memory_space<vmem>>, vector<1x32xf32>
    %c0_3 = arith.constant 0 : index
    %c0_4 = arith.constant 0 : index
    %2 = vector.load %arg6[%c0_3, %c0_4] : memref<32x32xf32, #tpu.memory_space<vmem>>, vector<32x32xf32>
    %c0_5 = arith.constant 0 : index
    %c0_6 = arith.constant 0 : index
    %3 = vector.load %arg7[%c0_5, %c0_6] : memref<1x32xf32, #tpu.memory_space<vmem>>, vector<1x32xf32>
    %c0_7 = arith.constant 0 : index
    %c0_8 = arith.constant 0 : index
    %4 = vector.load %arg0[%c0_7, %c0_8] : memref<16x16xf32, #tpu.memory_space<vmem>>, vector<16x16xf32>
    %c0_9 = arith.constant 0 : index
    %c0_10 = arith.constant 0 : index
    %5 = vector.load %arg1[%c0_9, %c0_10] : memref<16x1xf32, #tpu.memory_space<vmem>>, vector<16x1xf32>
    %cst = arith.constant dense<0.000000e+00> : vector<16x1xf32>
    %6 = tpu.matmul %4, %5, %cst {dimension_numbers = #tpu.dot_dimension_numbers<[1], [0], [0], [1], [0, 0, 1, 1], [], []>} : vector<16x16xf32>, vector<16x1xf32>, vector<16x1xf32> -> vector<16x1xf32>
    %7 = vector.broadcast %6 : vector<16x1xf32> to vector<16x32xf32>
    %8 = vector.broadcast %0 : vector<1x32xf32> to vector<16x32xf32>
    %9 = arith.mulf %7, %8 : vector<16x32xf32>
    %10 = vector.broadcast %1 : vector<1x32xf32> to vector<16x32xf32>
    %11 = arith.addf %9, %10 : vector<16x32xf32>
    %cst_11 = arith.constant 0.000000e+00 : f32
    %12 = vector.broadcast %cst_11 : f32 to vector<16x32xf32>
    %13 = arith.maximumf %11, %12 : vector<16x32xf32>
    %cst_12 = arith.constant dense<0.000000e+00> : vector<16x32xf32>
    %14 = tpu.matmul %13, %2, %cst_12 {dimension_numbers = #tpu.dot_dimension_numbers<[1], [0], [0], [1], [0, 0, 1, 1], [], []>} : vector<16x32xf32>, vector<32x32xf32>, vector<16x32xf32> -> vector<16x32xf32>
    %cst_13 = arith.constant dense<0.000000e+00> : vector<16x32xf32>
    %15 = tpu.matmul %4, %14, %cst_13 {dimension_numbers = #tpu.dot_dimension_numbers<[1], [0], [0], [1], [0, 0, 1, 1], [], []>} : vector<16x16xf32>, vector<16x32xf32>, vector<16x32xf32> -> vector<16x32xf32>
    %16 = vector.broadcast %3 : vector<1x32xf32> to vector<16x32xf32>
    %17 = arith.addf %15, %16 : vector<16x32xf32>
    %cst_14 = arith.constant 0.000000e+00 : f32
    %18 = vector.broadcast %cst_14 : f32 to vector<16x32xf32>
    %19 = arith.maximumf %17, %18 : vector<16x32xf32>
    %cst_15 = arith.constant dense<0.000000e+00> : vector<32xf32>
    %20 = vector.multi_reduction <add>, %19, %cst_15 [0] : vector<16x32xf32> to vector<32xf32>
    %21 = vector.shape_cast %20 : vector<32xf32> to vector<1x32xf32>
    %c0_16 = arith.constant 0 : index
    %c0_17 = arith.constant 0 : index
    %22 = vector.load %arg2[%c0_16, %c0_17] : memref<24x24xf32, #tpu.memory_space<vmem>>, vector<24x24xf32>
    %c0_18 = arith.constant 0 : index
    %c0_19 = arith.constant 0 : index
    %23 = vector.load %arg3[%c0_18, %c0_19] : memref<24x1xf32, #tpu.memory_space<vmem>>, vector<24x1xf32>
    %cst_20 = arith.constant dense<0.000000e+00> : vector<24x1xf32>
    %24 = tpu.matmul %22, %23, %cst_20 {dimension_numbers = #tpu.dot_dimension_numbers<[1], [0], [0], [1], [0, 0, 1, 1], [], []>} : vector<24x24xf32>, vector<24x1xf32>, vector<24x1xf32> -> vector<24x1xf32>
    %25 = vector.broadcast %24 : vector<24x1xf32> to vector<24x32xf32>
    %26 = vector.broadcast %0 : vector<1x32xf32> to vector<24x32xf32>
    %27 = arith.mulf %25, %26 : vector<24x32xf32>
    %28 = vector.broadcast %1 : vector<1x32xf32> to vector<24x32xf32>
    %29 = arith.addf %27, %28 : vector<24x32xf32>
    %cst_21 = arith.constant 0.000000e+00 : f32
    %30 = vector.broadcast %cst_21 : f32 to vector<24x32xf32>
    %31 = arith.maximumf %29, %30 : vector<24x32xf32>
    %cst_22 = arith.constant dense<0.000000e+00> : vector<24x32xf32>
    %32 = tpu.matmul %31, %2, %cst_22 {dimension_numbers = #tpu.dot_dimension_numbers<[1], [0], [0], [1], [0, 0, 1, 1], [], []>} : vector<24x32xf32>, vector<32x32xf32>, vector<24x32xf32> -> vector<24x32xf32>
    %cst_23 = arith.constant dense<0.000000e+00> : vector<24x32xf32>
    %33 = tpu.matmul %22, %32, %cst_23 {dimension_numbers = #tpu.dot_dimension_numbers<[1], [0], [0], [1], [0, 0, 1, 1], [], []>} : vector<24x24xf32>, vector<24x32xf32>, vector<24x32xf32> -> vector<24x32xf32>
    %34 = vector.broadcast %3 : vector<1x32xf32> to vector<24x32xf32>
    %35 = arith.addf %33, %34 : vector<24x32xf32>
    %cst_24 = arith.constant 0.000000e+00 : f32
    %36 = vector.broadcast %cst_24 : f32 to vector<24x32xf32>
    %37 = arith.maximumf %35, %36 : vector<24x32xf32>
    %cst_25 = arith.constant dense<0.000000e+00> : vector<32xf32>
    %38 = vector.multi_reduction <add>, %37, %cst_25 [0] : vector<24x32xf32> to vector<32xf32>
    %39 = vector.shape_cast %38 : vector<32xf32> to vector<1x32xf32>
    %c0_26 = arith.constant 0 : index
    %c0_27 = arith.constant 0 : index
    %40 = memref.load %arg12[%c0_26, %c0_27] : memref<1x1xf32, #tpu.memory_space<smem>>
    %c0_28 = arith.constant 0 : index
    %c0_29 = arith.constant 0 : index
    %41 = vector.load %arg8[%c0_28, %c0_29] : memref<1x32xf32, #tpu.memory_space<vmem>>, vector<1x32xf32>
    %42 = arith.mulf %21, %41 : vector<1x32xf32>
    %cst_30 = arith.constant dense<0.000000e+00> : vector<1xf32>
    %43 = vector.multi_reduction <add>, %42, %cst_30 [1] : vector<1x32xf32> to vector<1xf32>
    %44 = vector.shape_cast %43 : vector<1xf32> to vector<1x1xf32>
    %c0_31 = arith.constant 0 : index
    %c0_32 = arith.constant 0 : index
    %45 = vector.load %arg9[%c0_31, %c0_32] : memref<1x32xf32, #tpu.memory_space<vmem>>, vector<1x32xf32>
    %46 = arith.mulf %39, %45 : vector<1x32xf32>
    %cst_33 = arith.constant dense<0.000000e+00> : vector<1xf32>
    %47 = vector.multi_reduction <add>, %46, %cst_33 [1] : vector<1x32xf32> to vector<1xf32>
    %48 = vector.shape_cast %47 : vector<1xf32> to vector<1x1xf32>
    %49 = arith.addf %44, %48 : vector<1x1xf32>
    %c0_34 = arith.constant 0 : index
    %c0_35 = arith.constant 0 : index
    %50 = vector.load %arg10[%c0_34, %c0_35] : memref<1x1xf32, #tpu.memory_space<vmem>>, vector<1x1xf32>
    %51 = vector.broadcast %40 : f32 to vector<1x1xf32>
    %52 = arith.mulf %51, %50 : vector<1x1xf32>
    %53 = arith.addf %49, %52 : vector<1x1xf32>
    %c0_36 = arith.constant 0 : index
    %c0_37 = arith.constant 0 : index
    %54 = vector.load %arg11[%c0_36, %c0_37] : memref<1x1xf32, #tpu.memory_space<vmem>>, vector<1x1xf32>
    %55 = arith.addf %53, %54 : vector<1x1xf32>
    %c0_38 = arith.constant 0 : index
    %c0_39 = arith.constant 0 : index
    %56 = vector.load %arg13[%c0_38, %c0_39] : memref<1x1xf32, #tpu.memory_space<vmem>>, vector<1x1xf32>
    tpu.vector_store %arg13[%c0_38, %c0_39], %55 {strides = array<i32>} : memref<1x1xf32, #tpu.memory_space<vmem>>, vector<1x1xf32>,
    return
  }
}

</mosaic_0001>

<llo_original>
// kernel: dual_gcn_forward.1
$region0: #{dual_gcn_forward.1}
  #allocation0 [shape = 'u32[]', space=smem, size = 0x4, offset = 0x4, fixed_abs, tag = 'smem constant byte address 0x4 - core index']
  #allocation1 [shape = 'u32[144,128]{1,0:T(1,128)}', space=vmem, size = 0x12000, scoped, tag = 'internal scratch']
  #allocation2 [shape = 'f32[1,1]{1,0:T(1,128)S(1)}', space=vmem, size = 0x200, scoped, tag = 'scoped memory for dual_gcn_forward.1']
  #allocation3 [shape = 'f32[1,1]{1,0:T(1,128)S(1)}', space=vmem, size = 0x200, scoped, tag = 'scoped memory for dual_gcn_forward.1']
  #allocation4 [shape = 'f32[1,1]{1,0:T(1,128)S(6)}', space=smem, size = 0x200, scoped, tag = 'scoped memory for dual_gcn_forward.1']
  %s0 = inlined_call_operand.vmem [shape: f32[16,16], index: 0, kind: input, shape index: {}]
  %s1 = inlined_call_operand.vmem [shape: f32[16,1], index: 1, kind: input, shape index: {}]
  %s2 = inlined_call_operand.vmem [shape: f32[24,24], index: 2, kind: input, shape index: {}]
  %s3 = inlined_call_operand.vmem [shape: f32[24,1], index: 3, kind: input, shape index: {}]
  %s4 = inlined_call_operand.vmem [shape: f32[1,32], index: 4, kind: input, shape index: {}]
  %s5 = inlined_call_operand.vmem [shape: f32[1,32], index: 5, kind: input, shape index: {}]
  %s6 = inlined_call_operand.vmem [shape: f32[32,32], index: 6, kind: input, shape index: {}]
  %s7 = inlined_call_operand.vmem [shape: f32[1,32], index: 7, kind: input, shape index: {}]
  %s8 = inlined_call_operand.vmem [shape: f32[1,32], index: 8, kind: input, shape index: {}]
  %s9 = inlined_call_operand.vmem [shape: f32[1,32], index: 9, kind: input, shape index: {}]
  %s10 = inlined_call_operand.<no memory space> [shape: f32[1,1], index: 10, kind: input, shape index: {}]
  %s11 = inlined_call_operand.<no memory space> [shape: f32[1,1], index: 11, kind: input, shape index: {}]
  %s12 = inlined_call_operand.<no memory space> [shape: f32[1,1], index: 12, kind: input, shape index: {}]
  %s13 = inlined_call_operand.hbm [shape: f32[1,1], index: 13, kind: output, shape index: {}]
  %s14 = sld [smem:[#allocation0]]
  $region62: #{dual_gcn_forward.1} parent=0
    _
  %s16 = ssub.s32 1, %s14
  %s17 = scalar_select 0, %s16, %s14
  %v18 = vstv %s10
  %19 = vst [vmem:[#allocation2] sm:$0x1] %v18
  %v20 = vstv %s11
  %21 = vst [vmem:[#allocation3] sm:$0x1] %v20
  %22 = sst [smem:[#allocation4]] %s12
  $region1: #{dual_gcn_forward.1} parent=0
    #allocation5 [shape = 'u8[512]{0}', space=vmem, size = 0x400, scoped, tag = 'output window, operand 0, single buffered']
    #allocation6 [shape = 's32[1]{0}', space=sflag, size = 0x4, scoped, tag = 'scoped memory for dual_gcn_forward.1']
    %23 = vsyncpa [#allocation6], 0
    // Predicated region
    $region2: #{dual_gcn_forward.1} parent=1 // pred_check
      _
    $region3: #{dual_gcn_forward.1} parent=1 // pred_check_branch
      %25 = sbr.rel (0) target = $region5
    $region4: #{dual_gcn_forward.1} parent=1 // pred_region
      _
    $region5: #{dual_gcn_forward.1} parent=1 // pred_fallthru
      _
    // Predicated region
    $region6: #{dual_gcn_forward.1} parent=1 // pred_check
      _
    $region7: #{dual_gcn_forward.1} parent=1 // pred_check_branch
      %27 = sbr.rel (0) target = $region9
    $region8: #{dual_gcn_forward.1} parent=1 // pred_region
      _
    $region9: #{dual_gcn_forward.1} parent=1 // pred_fallthru
      _
    // Predicated region
    $region10: #{dual_gcn_forward.1} parent=1 // pred_check
      _
    $region11: #{dual_gcn_forward.1} parent=1 // pred_check_branch
      %29 = sbr.rel (0) target = $region13
    $region12: #{dual_gcn_forward.1} parent=1 // pred_region
      _
    $region13: #{dual_gcn_forward.1} parent=1 // pred_fallthru
      _
    // Predicated region
    $region14: #{dual_gcn_forward.1} parent=1 // pred_check
      _
    $region15: #{dual_gcn_forward.1} parent=1 // pred_check_branch
      %31 = sbr.rel (0) target = $region17
    $region16: #{dual_gcn_forward.1} parent=1 // pred_region
      _
    $region17: #{dual_gcn_forward.1} parent=1 // pred_fallthru
      _
    // Predicated region
    $region18: #{dual_gcn_forward.1} parent=1 // pred_check
      _
    $region19: #{dual_gcn_forward.1} parent=1 // pred_check_branch
      %33 = sbr.rel (0) target = $region21
    $region20: #{dual_gcn_forward.1} parent=1 // pred_region
      _
    $region21: #{dual_gcn_forward.1} parent=1 // pred_fallthru
      _
    // Predicated region
    $region22: #{dual_gcn_forward.1} parent=1 // pred_check
      _
    $region23: #{dual_gcn_forward.1} parent=1 // pred_check_branch
      %35 = sbr.rel (0) target = $region25
    $region24: #{dual_gcn_forward.1} parent=1 // pred_region
      _
    $region25: #{dual_gcn_forward.1} parent=1 // pred_fallthru
      _
    // Predicated region
    $region26: #{dual_gcn_forward.1} parent=1 // pred_check
      _
    $region27: #{dual_gcn_forward.1} parent=1 // pred_check_branch
      %37 = sbr.rel (0) target = $region29
    $region28: #{dual_gcn_forward.1} parent=1 // pred_region
      _
    $region29: #{dual_gcn_forward.1} parent=1 // pred_fallthru
      _
    // Predicated region
    $region30: #{dual_gcn_forward.1} parent=1 // pred_check
      _
    $region31: #{dual_gcn_forward.1} parent=1 // pred_check_branch
      %39 = sbr.rel (0) target = $region33
    $region32: #{dual_gcn_forward.1} parent=1 // pred_region
      _
    $region33: #{dual_gcn_forward.1} parent=1 // pred_fallthru
      _
    // Predicated region
    $region34: #{dual_gcn_forward.1} parent=1 // pred_check
      _
    $region35: #{dual_gcn_forward.1} parent=1 // pred_check_branch
      %41 = sbr.rel (0) target = $region37
    $region36: #{dual_gcn_forward.1} parent=1 // pred_region
      _
    $region37: #{dual_gcn_forward.1} parent=1 // pred_fallthru
      _
    // Predicated region
    $region38: #{dual_gcn_forward.1} parent=1 // pred_check
      _
    $region39: #{dual_gcn_forward.1} parent=1 // pred_check_branch
      %43 = sbr.rel (0) target = $region41
    $region40: #{dual_gcn_forward.1} parent=1 // pred_region
      _
    $region41: #{dual_gcn_forward.1} parent=1 // pred_fallthru
      _
    // Predicated region
    $region42: #{dual_gcn_forward.1} parent=1 // pred_check
      _
    $region43: #{dual_gcn_forward.1} parent=1 // pred_check_branch
      %45 = sbr.rel (0) target = $region45
    $region44: #{dual_gcn_forward.1} parent=1 // pred_region
      _
    $region45: #{dual_gcn_forward.1} parent=1 // pred_fallthru
      _
    // Predicated region
    $region46: #{dual_gcn_forward.1} parent=1 // pred_check
      _
    $region47: #{dual_gcn_forward.1} parent=1 // pred_check_branch
      %47 = sbr.rel (0) target = $region49
    $region48: #{dual_gcn_forward.1} parent=1 // pred_region
      _
    $region49: #{dual_gcn_forward.1} parent=1 // pred_fallthru
      _
    // Predicated region
    $region50: #{dual_gcn_forward.1} parent=1 // pred_check
      _
    $region51: #{dual_gcn_forward.1} parent=1 // pred_check_branch
      %49 = sbr.rel (0) target = $region53
    $region52: #{dual_gcn_forward.1} parent=1 // pred_region
      _
    $region53: #{dual_gcn_forward.1} parent=1 // pred_fallthru
      _
    %v50 = vld [vmem:[%s4] sm:$0x1]
    %v51 = vld [vmem:[%s5] sm:$0x1]
    %v52 = vld [vmem:[%s6] sm:$0xff]
    %v53 = vld [vmem:[%s6 + $0x8] sm:$0xff]
    %v54 = vld [vmem:[%s6 + $0x10] sm:$0xff]
    %v55 = vld [vmem:[%s6 + $0x18] sm:$0xff]
    %v56 = vld [vmem:[%s7] sm:$0x1]
    %v57 = vld [vmem:[%s0] sm:$0xff]
    %v58 = vld [vmem:[%s0 + $0x8] sm:$0xff]
    %v59 = vld [vmem:[%s1] sm:$0xff]
    %v60 = vld [vmem:[%s1 + $0x8] sm:$0xff]
    %vm61 = vcmask 130048
    %v63 = vsel %vm61, %v57, 0
    %v66 = vsel %vm61, %v58, 0
    %68 = vmatprep.subr.mxu0 0.0
    %69 = vmatpush1.msra.mxu0 %v59
    %70 = vmatprep.subr.mxu0 0.0
    %71 = vmatpush1.msra.mxu0 %v60
    %72 = vmatprep.subr.mxu0 0.0
    %73 = vmatpush1.msra.mxu0 0.0
    %74 = vmatprep.subr.mxu0 0.0
    %75 = vmatpush1.msra.mxu0 0.0
    %76 = vmatprep.subr.mxu0 0.0
    %77 = vmatpush1.msra.mxu0 0.0
    %78 = vmatprep.subr.mxu0 0.0
    %79 = vmatpush1.msra.mxu0 0.0
    %80 = vmatprep.subr.mxu0 0.0
    %81 = vmatpush1.msra.mxu0 0.0
    %82 = vmatprep.subr.mxu0 0.0
    %83 = vmatpush1.msra.mxu0 0.0
    %84 = vmatprep.subr.mxu0 0.0
    %85 = vmatpush1.msra.mxu0 0.0
    %86 = vmatprep.subr.mxu0 0.0
    %87 = vmatpush1.msra.mxu0 0.0
    %88 = vmatprep.subr.mxu0 0.0
    %89 = vmatpush1.msra.mxu0 0.0
    %90 = vmatprep.subr.mxu0 0.0
    %91 = vmatpush1.msra.mxu0 0.0
    %92 = vmatprep.subr.mxu0 0.0
    %93 = vmatpush1.msra.mxu0 0.0
    %94 = vmatprep.subr.mxu0 0.0
    %95 = vmatpush1.msra.mxu0 0.0
    %96 = vmatprep.subr.mxu0 0.0
    %97 = vmatpush1.msra.mxu0 0.0
    %98 = vmatprep.subr.mxu0 0.0
    %99 = vmatpush1.msra.mxu0 0.0
    %100 = vmatprep.subr.mxu0 0.0
    %101 = vmatpush1.msra.mxu0 0.0
    %102 = vmatprep.subr.mxu0 0.0
    %103 = vmatpush1.msra.mxu0 0.0
    %104 = vmatprep.subr.mxu0 0.0
    %105 = vmatpush1.msra.mxu0 0.0
    %106 = vmatprep.subr.mxu0 0.0
    %107 = vmatpush1.msra.mxu0 0.0
    %108 = vmatprep.subr.mxu0 0.0
    %109 = vmatpush1.msra.mxu0 0.0
    %110 = vmatprep.subr.mxu0 0.0
    %111 = vmatpush1.msra.mxu0 0.0
    %112 = vmatprep.subr.mxu0 0.0
    %113 = vmatpush1.msra.mxu0 0.0
    %114 = vmatprep.subr.mxu0 0.0
    %115 = vmatpush1.msra.mxu0 0.0
    %116 = vmatprep.subr.mxu0 0.0
    %117 = vmatpush1.msra.mxu0 0.0
    %118 = vmatprep.subr.mxu0 0.0
    %119 = vmatpush1.msra.mxu0 0.0
    %120 = vmatprep.subr.mxu0 0.0
    %121 = vmatpush1.msra.mxu0 0.0
    %122 = vmatprep.subr.mxu0 0.0
    %123 = vmatpush1.msra.mxu0 0.0
    %124 = vmatprep.subr.mxu0 0.0
    %125 = vmatpush1.msra.mxu0 0.0
    %126 = vmatprep.subr.mxu0 0.0
    %127 = vmatpush1.msra.mxu0 0.0
    %128 = vmatprep.subr.mxu0 0.0
    %129 = vmatpush1.msra.mxu0 0.0
    %130 = vmatprep.subr.mxu0 0.0
    %131 = vmatpush1.msra.mxu0 0.0
    %132 = vmatprep.mubr.f32.mxu0 0.0
    %133 = vmatmul.mubr.f32.gmra.mrb[0].mxu0 %v63
    %v134 = vpop.f32.mrb[0].mxu0
    %v135 = vadd.f32 0.0, %v134
    %v136 = vpop.f32.mrb[0].mxu0
    %137 = vmatprep.mubr.f32.mxu0 0.0
    %138 = vmatmul.mubr.f32.gmra.mrb[0].mxu0 %v66
    %v139 = vpop.f32.mrb[0].mxu0
    %v140 = vadd.f32 0.0, %v139
    %v141 = vpop.f32.mrb[0].mxu0
    %142 = vdwg.mxu0
    %144 = vset.pattern.permute.xlu0 0
    %145 = vperm.xlu0 %144, %v135
    %v146 = vpop.permute.xlu0 %145
    %149 = vset.pattern.permute.xlu0 0
    %150 = vperm.xlu0 %149, %v140
    %v151 = vpop.permute.xlu0 %150
    %v154 = vlaneseq
    %v155 = vshrl.u32 %v154, 7
    %v156 = vsub.s32 0, %v155
    %v157 = vrot.slane %v50, %v156
    %v159 = vmul.f32 %v146, %v157
    %v160 = vmul.f32 %v151, %v157
    %v162 = vlaneseq
    %v163 = vshrl.u32 %v162, 7
    %v164 = vsub.s32 0, %v163
    %v165 = vrot.slane %v51, %v164
    %v167 = vadd.f32 %v159, %v165
    %v168 = vadd.f32 %v160, %v165
    %v169 = vmax.f32 %v167, 0.0
    %v170 = vmax.f32 %v168, 0.0
    %vm171 = vcmask 261120
    %v173 = vsel %vm171, %v169, 0
    %v176 = vsel %vm171, %v170, 0
    %178 = vmatprep.subr.mxu0 0.0
    %179 = vmatpush1.msra.mxu0 %v52
    %180 = vmatprep.subr.mxu0 0.0
    %181 = vmatpush1.msra.mxu0 %v53
    %182 = vmatprep.subr.mxu0 0.0
    %183 = vmatpush1.msra.mxu0 %v54
    %184 = vmatprep.subr.mxu0 0.0
    %185 = vmatpush1.msra.mxu0 %v55
    %186 = vmatprep.subr.mxu0 0.0
    %187 = vmatpush1.msra.mxu0 0.0
    %188 = vmatprep.subr.mxu0 0.0
    %189 = vmatpush1.msra.mxu0 0.0
    %190 = vmatprep.subr.mxu0 0.0
    %191 = vmatpush1.msra.mxu0 0.0
    %192 = vmatprep.subr.mxu0 0.0
    %193 = vmatpush1.msra.mxu0 0.0
    %194 = vmatprep.subr.mxu0 0.0
    %195 = vmatpush1.msra.mxu0 0.0
    %196 = vmatprep.subr.mxu0 0.0
    %197 = vmatpush1.msra.mxu0 0.0
    %198 = vmatprep.subr.mxu0 0.0
    %199 = vmatpush1.msra.mxu0 0.0
    %200 = vmatprep.subr.mxu0 0.0
    %201 = vmatpush1.msra.mxu0 0.0
    %202 = vmatprep.subr.mxu0 0.0
    %203 = vmatpush1.msra.mxu0 0.0
    %204 = vmatprep.subr.mxu0 0.0
    %205 = vmatpush1.msra.mxu0 0.0
    %206 = vmatprep.subr.mxu0 0.0
    %207 = vmatpush1.msra.mxu0 0.0
    %208 = vmatprep.subr.mxu0 0.0
    %209 = vmatpush1.msra.mxu0 0.0
    %210 = vmatprep.subr.mxu0 0.0
    %211 = vmatpush1.msra.mxu0 0.0
    %212 = vmatprep.subr.mxu0 0.0
    %213 = vmatpush1.msra.mxu0 0.0
    %214 = vmatprep.subr.mxu0 0.0
    %215 = vmatpush1.msra.mxu0 0.0
    %216 = vmatprep.subr.mxu0 0.0
    %217 = vmatpush1.msra.mxu0 0.0
    %218 = vmatprep.subr.mxu0 0.0
    %219 = vmatpush1.msra.mxu0 0.0
    %220 = vmatprep.subr.mxu0 0.0
    %221 = vmatpush1.msra.mxu0 0.0
    %222 = vmatprep.subr.mxu0 0.0
    %223 = vmatpush1.msra.mxu0 0.0
    %224 = vmatprep.subr.mxu0 0.0
    %225 = vmatpush1.msra.mxu0 0.0
    %226 = vmatprep.subr.mxu0 0.0
    %227 = vmatpush1.msra.mxu0 0.0
    %228 = vmatprep.subr.mxu0 0.0
    %229 = vmatpush1.msra.mxu0 0.0
    %230 = vmatprep.subr.mxu0 0.0
    %231 = vmatpush1.msra.mxu0 0.0
    %232 = vmatprep.subr.mxu0 0.0
    %233 = vmatpush1.msra.mxu0 0.0
    %234 = vmatprep.subr.mxu0 0.0
    %235 = vmatpush1.msra.mxu0 0.0
    %236 = vmatprep.subr.mxu0 0.0
    %237 = vmatpush1.msra.mxu0 0.0
    %238 = vmatprep.subr.mxu0 0.0
    %239 = vmatpush1.msra.mxu0 0.0
    %240 = vmatprep.subr.mxu0 0.0
    %241 = vmatpush1.msra.mxu0 0.0
    %242 = vmatprep.mubr.f32.mxu0 0.0
    %243 = vmatmul.mubr.f32.gmra.mrb[0].mxu0 %v173
    %v244 = vpop.f32.mrb[0].mxu0
    %v245 = vadd.f32 0.0, %v244
    %v246 = vpop.f32.mrb[0].mxu0
    %247 = vmatprep.mubr.f32.mxu0 0.0
    %248 = vmatmul.mubr.f32.gmra.mrb[0].mxu0 %v176
    %v249 = vpop.f32.mrb[0].mxu0
    %v250 = vadd.f32 0.0, %v249
    %v251 = vpop.f32.mrb[0].mxu0
    %252 = vdwg.mxu0
    %v254 = vlaneseq
    %v255 = vshrl.u32 %v254, 7
    %v256 = vsub.s32 0, %v255
    %v257 = vrot.slane %v56, %v256
    %259 = vmatprep.subr.mxu0 0.0
    %260 = vmatpush1.msra.mxu0 %v245
    %261 = vmatprep.subr.mxu0 0.0
    %262 = vmatpush1.msra.mxu0 %v250
    %263 = vmatprep.subr.mxu0 0.0
    %264 = vmatpush1.msra.mxu0 0.0
    %265 = vmatprep.subr.mxu0 0.0
    %266 = vmatpush1.msra.mxu0 0.0
    %267 = vmatprep.subr.mxu0 0.0
    %268 = vmatpush1.msra.mxu0 0.0
    %269 = vmatprep.subr.mxu0 0.0
    %270 = vmatpush1.msra.mxu0 0.0
    %271 = vmatprep.subr.mxu0 0.0
    %272 = vmatpush1.msra.mxu0 0.0
    %273 = vmatprep.subr.mxu0 0.0
    %274 = vmatpush1.msra.mxu0 0.0
    %275 = vmatprep.subr.mxu0 0.0
    %276 = vmatpush1.msra.mxu0 0.0
    %277 = vmatprep.subr.mxu0 0.0
    %278 = vmatpush1.msra.mxu0 0.0
    %279 = vmatprep.subr.mxu0 0.0
    %280 = vmatpush1.msra.mxu0 0.0
    %281 = vmatprep.subr.mxu0 0.0
    %282 = vmatpush1.msra.mxu0 0.0
    %283 = vmatprep.subr.mxu0 0.0
    %284 = vmatpush1.msra.mxu0 0.0
    %285 = vmatprep.subr.mxu0 0.0
    %286 = vmatpush1.msra.mxu0 0.0
    %287 = vmatprep.subr.mxu0 0.0
    %288 = vmatpush1.msra.mxu0 0.0
    %289 = vmatprep.subr.mxu0 0.0
    %290 = vmatpush1.msra.mxu0 0.0
    %291 = vmatprep.subr.mxu0 0.0
    %292 = vmatpush1.msra.mxu0 0.0
    %293 = vmatprep.subr.mxu0 0.0
    %294 = vmatpush1.msra.mxu0 0.0
    %295 = vmatprep.subr.mxu0 0.0
    %296 = vmatpush1.msra.mxu0 0.0
    %297 = vmatprep.subr.mxu0 0.0
    %298 = vmatpush1.msra.mxu0 0.0
    %299 = vmatprep.subr.mxu0 0.0
    %300 = vmatpush1.msra.mxu0 0.0
    %301 = vmatprep.subr.mxu0 0.0
    %302 = vmatpush1.msra.mxu0 0.0
    %303 = vmatprep.subr.mxu0 0.0
    %304 = vmatpush1.msra.mxu0 0.0
    %305 = vmatprep.subr.mxu0 0.0
    %306 = vmatpush1.msra.mxu0 0.0
    %307 = vmatprep.subr.mxu0 0.0
    %308 = vmatpush1.msra.mxu0 0.0
    %309 = vmatprep.subr.mxu0 0.0
    %310 = vmatpush1.msra.mxu0 0.0
    %311 = vmatprep.subr.mxu0 0.0
    %312 = vmatpush1.msra.mxu0 0.0
    %313 = vmatprep.subr.mxu0 0.0
    %314 = vmatpush1.msra.mxu0 0.0
    %315 = vmatprep.subr.mxu0 0.0
    %316 = vmatpush1.msra.mxu0 0.0
    %317 = vmatprep.subr.mxu0 0.0
    %318 = vmatpush1.msra.mxu0 0.0
    %319 = vmatprep.subr.mxu0 0.0
    %320 = vmatpush1.msra.mxu0 0.0
    %321 = vmatprep.subr.mxu0 0.0
    %322 = vmatpush1.msra.mxu0 0.0
    %323 = vmatprep.mubr.f32.mxu0 0.0
    %324 = vmatmul.mubr.f32.gmra.mrb[0].mxu0 %v63
    %v325 = vpop.f32.mrb[0].mxu0
    %v326 = vadd.f32 %v257, %v325
    %v327 = vpop.f32.mrb[0].mxu0
    %328 = vmatprep.mubr.f32.mxu0 0.0
    %329 = vmatmul.mubr.f32.gmra.mrb[0].mxu0 %v66
    %v330 = vpop.f32.mrb[0].mxu0
    %v331 = vadd.f32 %v257, %v330
    %v332 = vpop.f32.mrb[0].mxu0
    %333 = vdwg.mxu0
    %v334 = vmax.f32 %v326, 0.0
    %v335 = vmax.f32 %v331, 0.0
    %v336 = vsel %vm171, %v334, 0.0
    %v337 = vsel %vm171, %v335, 0.0
    %v338 = vadd.f32 %v336, %v337
    %v339 = vrot.slane %v338, 4
    %v340 = vadd.f32 %v338, %v339
    %v341 = vrot.slane %v340, 2
    %v342 = vadd.f32 %v340, %v341
    %v343 = vrot.slane %v342, 1
    %v344 = vadd.f32 %v342, %v343
    %v345 = vld [vmem:[%s2] sm:$0xff]
    %v346 = vld [vmem:[%s2 + $0x8] sm:$0xff]
    %v347 = vld [vmem:[%s2 + $0x10] sm:$0xff]
    %v348 = vld [vmem:[%s3] sm:$0xff]
    %v349 = vld [vmem:[%s3 + $0x8] sm:$0xff]
    %v350 = vld [vmem:[%s3 + $0x10] sm:$0xff]
    %vm351 = vcmask 195584
    %v353 = vsel %vm351, %v345, 0
    %v356 = vsel %vm351, %v346, 0
    %v359 = vsel %vm351, %v347, 0
    %361 = vmatprep.subr.mxu0 0.0
    %362 = vmatpush1.msra.mxu0 %v348
    %363 = vmatprep.subr.mxu0 0.0
    %364 = vmatpush1.msra.mxu0 %v349
    %365 = vmatprep.subr.mxu0 0.0
    %366 = vmatpush1.msra.mxu0 %v350
    %367 = vmatprep.subr.mxu0 0.0
    %368 = vmatpush1.msra.mxu0 0.0
    %369 = vmatprep.subr.mxu0 0.0
    %370 = vmatpush1.msra.mxu0 0.0
    %371 = vmatprep.subr.mxu0 0.0
    %372 = vmatpush1.msra.mxu0 0.0
    %373 = vmatprep.subr.mxu0 0.0
    %374 = vmatpush1.msra.mxu0 0.0
    %375 = vmatprep.subr.mxu0 0.0
    %376 = vmatpush1.msra.mxu0 0.0
    %377 = vmatprep.subr.mxu0 0.0
    %378 = vmatpush1.msra.mxu0 0.0
    %379 = vmatprep.subr.mxu0 0.0
    %380 = vmatpush1.msra.mxu0 0.0
    %381 = vmatprep.subr.mxu0 0.0
    %382 = vmatpush1.msra.mxu0 0.0
    %383 = vmatprep.subr.mxu0 0.0
    %384 = vmatpush1.msra.mxu0 0.0
    %385 = vmatprep.subr.mxu0 0.0
    %386 = vmatpush1.msra.mxu0 0.0
    %387 = vmatprep.subr.mxu0 0.0
    %388 = vmatpush1.msra.mxu0 0.0
    %389 = vmatprep.subr.mxu0 0.0
    %390 = vmatpush1.msra.mxu0 0.0
    %391 = vmatprep.subr.mxu0 0.0
    %392 = vmatpush1.msra.mxu0 0.0
    %393 = vmatprep.subr.mxu0 0.0
    %394 = vmatpush1.msra.mxu0 0.0
    %395 = vmatprep.subr.mxu0 0.0
    %396 = vmatpush1.msra.mxu0 0.0
    %397 = vmatprep.subr.mxu0 0.0
    %398 = vmatpush1.msra.mxu0 0.0
    %399 = vmatprep.subr.mxu0 0.0
    %400 = vmatpush1.msra.mxu0 0.0
    %401 = vmatprep.subr.mxu0 0.0
    %402 = vmatpush1.msra.mxu0 0.0
    %403 = vmatprep.subr.mxu0 0.0
    %404 = vmatpush1.msra.mxu0 0.0
    %405 = vmatprep.subr.mxu0 0.0
    %406 = vmatpush1.msra.mxu0 0.0
    %407 = vmatprep.subr.mxu0 0.0
    %408 = vmatpush1.msra.mxu0 0.0
    %409 = vmatprep.subr.mxu0 0.0
    %410 = vmatpush1.msra.mxu0 0.0
    %411 = vmatprep.subr.mxu0 0.0
    %412 = vmatpush1.msra.mxu0 0.0
    %413 = vmatprep.subr.mxu0 0.0
    %414 = vmatpush1.msra.mxu0 0.0
    %415 = vmatprep.subr.mxu0 0.0
    %416 = vmatpush1.msra.mxu0 0.0
    %417 = vmatprep.subr.mxu0 0.0
    %418 = vmatpush1.msra.mxu0 0.0
    %419 = vmatprep.subr.mxu0 0.0
    %420 = vmatpush1.msra.mxu0 0.0
    %421 = vmatprep.subr.mxu0 0.0
    %422 = vmatpush1.msra.mxu0 0.0
    %423 = vmatprep.subr.mxu0 0.0
    %424 = vmatpush1.msra.mxu0 0.0
    %425 = vmatprep.mubr.f32.mxu0 0.0
    %426 = vmatmul.mubr.f32.gmra.mrb[0].mxu0 %v353
    %v427 = vpop.f32.mrb[0].mxu0
    %v428 = vadd.f32 0.0, %v427
    %v429 = vpop.f32.mrb[0].mxu0
    %430 = vmatprep.mubr.f32.mxu0 0.0
    %431 = vmatmul.mubr.f32.gmra.mrb[0].mxu0 %v356
    %v432 = vpop.f32.mrb[0].mxu0
    %v433 = vadd.f32 0.0, %v432
    %v434 = vpop.f32.mrb[0].mxu0
    %435 = vmatprep.mubr.f32.mxu0 0.0
    %436 = vmatmul.mubr.f32.gmra.mrb[0].mxu0 %v359
    %v437 = vpop.f32.mrb[0].mxu0
    %v438 = vadd.f32 0.0, %v437
    %v439 = vpop.f32.mrb[0].mxu0
    %440 = vdwg.mxu0
    %442 = vset.pattern.permute.xlu0 0
    %443 = vperm.xlu0 %442, %v428
    %v444 = vpop.permute.xlu0 %443
    %447 = vset.pattern.permute.xlu0 0
    %448 = vperm.xlu0 %447, %v433
    %v449 = vpop.permute.xlu0 %448
    %452 = vset.pattern.permute.xlu0 0
    %453 = vperm.xlu0 %452, %v438
    %v454 = vpop.permute.xlu0 %453
    %v456 = vmul.f32 %v444, %v157
    %v457 = vmul.f32 %v449, %v157
    %v458 = vmul.f32 %v454, %v157
    %v459 = vadd.f32 %v456, %v165
    %v460 = vadd.f32 %v457, %v165
    %v461 = vadd.f32 %v458, %v165
    %v462 = vmax.f32 %v459, 0.0
    %v463 = vmax.f32 %v460, 0.0
    %v464 = vmax.f32 %v461, 0.0
    %v466 = vsel %vm171, %v462, 0
    %v469 = vsel %vm171, %v463, 0
    %v472 = vsel %vm171, %v464, 0
    %474 = vmatprep.subr.mxu0 0.0
    %475 = vmatpush1.msra.mxu0 %v52
    %476 = vmatprep.subr.mxu0 0.0
    %477 = vmatpush1.msra.mxu0 %v53
    %478 = vmatprep.subr.mxu0 0.0
    %479 = vmatpush1.msra.mxu0 %v54
    %480 = vmatprep.subr.mxu0 0.0
    %481 = vmatpush1.msra.mxu0 %v55
    %482 = vmatprep.subr.mxu0 0.0
    %483 = vmatpush1.msra.mxu0 0.0
    %484 = vmatprep.subr.mxu0 0.0
    %485 = vmatpush1.msra.mxu0 0.0
    %486 = vmatprep.subr.mxu0 0.0
    %487 = vmatpush1.msra.mxu0 0.0
    %488 = vmatprep.subr.mxu0 0.0
    %489 = vmatpush1.msra.mxu0 0.0
    %490 = vmatprep.subr.mxu0 0.0
    %491 = vmatpush1.msra.mxu0 0.0
    %492 = vmatprep.subr.mxu0 0.0
    %493 = vmatpush1.msra.mxu0 0.0
    %494 = vmatprep.subr.mxu0 0.0
    %495 = vmatpush1.msra.mxu0 0.0
    %496 = vmatprep.subr.mxu0 0.0
    %497 = vmatpush1.msra.mxu0 0.0
    %498 = vmatprep.subr.mxu0 0.0
    %499 = vmatpush1.msra.mxu0 0.0
    %500 = vmatprep.subr.mxu0 0.0
    %501 = vmatpush1.msra.mxu0 0.0
    %502 = vmatprep.subr.mxu0 0.0
    %503 = vmatpush1.msra.mxu0 0.0
    %504 = vmatprep.subr.mxu0 0.0
    %505 = vmatpush1.msra.mxu0 0.0
    %506 = vmatprep.subr.mxu0 0.0
    %507 = vmatpush1.msra.mxu0 0.0
    %508 = vmatprep.subr.mxu0 0.0
    %509 = vmatpush1.msra.mxu0 0.0
    %510 = vmatprep.subr.mxu0 0.0
    %511 = vmatpush1.msra.mxu0 0.0
    %512 = vmatprep.subr.mxu0 0.0
    %513 = vmatpush1.msra.mxu0 0.0
    %514 = vmatprep.subr.mxu0 0.0
    %515 = vmatpush1.msra.mxu0 0.0
    %516 = vmatprep.subr.mxu0 0.0
    %517 = vmatpush1.msra.mxu0 0.0
    %518 = vmatprep.subr.mxu0 0.0
    %519 = vmatpush1.msra.mxu0 0.0
    %520 = vmatprep.subr.mxu0 0.0
    %521 = vmatpush1.msra.mxu0 0.0
    %522 = vmatprep.subr.mxu0 0.0
    %523 = vmatpush1.msra.mxu0 0.0
    %524 = vmatprep.subr.mxu0 0.0
    %525 = vmatpush1.msra.mxu0 0.0
    %526 = vmatprep.subr.mxu0 0.0
    %527 = vmatpush1.msra.mxu0 0.0
    %528 = vmatprep.subr.mxu0 0.0
    %529 = vmatpush1.msra.mxu0 0.0
    %530 = vmatprep.subr.mxu0 0.0
    %531 = vmatpush1.msra.mxu0 0.0
    %532 = vmatprep.subr.mxu0 0.0
    %533 = vmatpush1.msra.mxu0 0.0
    %534 = vmatprep.subr.mxu0 0.0
    %535 = vmatpush1.msra.mxu0 0.0
    %536 = vmatprep.subr.mxu0 0.0
    %537 = vmatpush1.msra.mxu0 0.0
    %538 = vmatprep.mubr.f32.mxu0 0.0
    %539 = vmatmul.mubr.f32.gmra.mrb[0].mxu0 %v466
    %v540 = vpop.f32.mrb[0].mxu0
    %v541 = vadd.f32 0.0, %v540
    %v542 = vpop.f32.mrb[0].mxu0
    %543 = vmatprep.mubr.f32.mxu0 0.0
    %544 = vmatmul.mubr.f32.gmra.mrb[0].mxu0 %v469
    %v545 = vpop.f32.mrb[0].mxu0
    %v546 = vadd.f32 0.0, %v545
    %v547 = vpop.f32.mrb[0].mxu0
    %548 = vmatprep.mubr.f32.mxu0 0.0
    %549 = vmatmul.mubr.f32.gmra.mrb[0].mxu0 %v472
    %v550 = vpop.f32.mrb[0].mxu0
    %v551 = vadd.f32 0.0, %v550
    %v552 = vpop.f32.mrb[0].mxu0
    %553 = vdwg.mxu0
    %554 = vmatprep.subr.mxu0 0.0
    %555 = vmatpush1.msra.mxu0 %v541
    %556 = vmatprep.subr.mxu0 0.0
    %557 = vmatpush1.msra.mxu0 %v546
    %558 = vmatprep.subr.mxu0 0.0
    %559 = vmatpush1.msra.mxu0 %v551
    %560 = vmatprep.subr.mxu0 0.0
    %561 = vmatpush1.msra.mxu0 0.0
    %562 = vmatprep.subr.mxu0 0.0
    %563 = vmatpush1.msra.mxu0 0.0
    %564 = vmatprep.subr.mxu0 0.0
    %565 = vmatpush1.msra.mxu0 0.0
    %566 = vmatprep.subr.mxu0 0.0
    %567 = vmatpush1.msra.mxu0 0.0
    %568 = vmatprep.subr.mxu0 0.0
    %569 = vmatpush1.msra.mxu0 0.0
    %570 = vmatprep.subr.mxu0 0.0
    %571 = vmatpush1.msra.mxu0 0.0
    %572 = vmatprep.subr.mxu0 0.0
    %573 = vmatpush1.msra.mxu0 0.0
    %574 = vmatprep.subr.mxu0 0.0
    %575 = vmatpush1.msra.mxu0 0.0
    %576 = vmatprep.subr.mxu0 0.0
    %577 = vmatpush1.msra.mxu0 0.0
    %578 = vmatprep.subr.mxu0 0.0
    %579 = vmatpush1.msra.mxu0 0.0
    %580 = vmatprep.subr.mxu0 0.0
    %581 = vmatpush1.msra.mxu0 0.0
    %582 = vmatprep.subr.mxu0 0.0
    %583 = vmatpush1.msra.mxu0 0.0
    %584 = vmatprep.subr.mxu0 0.0
    %585 = vmatpush1.msra.mxu0 0.0
    %586 = vmatprep.subr.mxu0 0.0
    %587 = vmatpush1.msra.mxu0 0.0
    %588 = vmatprep.subr.mxu0 0.0
    %589 = vmatpush1.msra.mxu0 0.0
    %590 = vmatprep.subr.mxu0 0.0
    %591 = vmatpush1.msra.mxu0 0.0
    %592 = vmatprep.subr.mxu0 0.0
    %593 = vmatpush1.msra.mxu0 0.0
    %594 = vmatprep.subr.mxu0 0.0
    %595 = vmatpush1.msra.mxu0 0.0
    %596 = vmatprep.subr.mxu0 0.0
    %597 = vmatpush1.msra.mxu0 0.0
    %598 = vmatprep.subr.mxu0 0.0
    %599 = vmatpush1.msra.mxu0 0.0
    %600 = vmatprep.subr.mxu0 0.0
    %601 = vmatpush1.msra.mxu0 0.0
    %602 = vmatprep.subr.mxu0 0.0
    %603 = vmatpush1.msra.mxu0 0.0
    %604 = vmatprep.subr.mxu0 0.0
    %605 = vmatpush1.msra.mxu0 0.0
    %606 = vmatprep.subr.mxu0 0.0
    %607 = vmatpush1.msra.mxu0 0.0
    %608 = vmatprep.subr.mxu0 0.0
    %609 = vmatpush1.msra.mxu0 0.0
    %610 = vmatprep.subr.mxu0 0.0
    %611 = vmatpush1.msra.mxu0 0.0
    %612 = vmatprep.subr.mxu0 0.0
    %613 = vmatpush1.msra.mxu0 0.0
    %614 = vmatprep.subr.mxu0 0.0
    %615 = vmatpush1.msra.mxu0 0.0
    %616 = vmatprep.subr.mxu0 0.0
    %617 = vmatpush1.msra.mxu0 0.0
    %618 = vmatprep.mubr.f32.mxu0 0.0
    %619 = vmatmul.mubr.f32.gmra.mrb[0].mxu0 %v353
    %v620 = vpop.f32.mrb[0].mxu0
    %v621 = vadd.f32 %v257, %v620
    %v622 = vpop.f32.mrb[0].mxu0
    %623 = vmatprep.mubr.f32.mxu0 0.0
    %624 = vmatmul.mubr.f32.gmra.mrb[0].mxu0 %v356
    %v625 = vpop.f32.mrb[0].mxu0
    %v626 = vadd.f32 %v257, %v625
    %v627 = vpop.f32.mrb[0].mxu0
    %628 = vmatprep.mubr.f32.mxu0 0.0
    %629 = vmatmul.mubr.f32.gmra.mrb[0].mxu0 %v359
    %v630 = vpop.f32.mrb[0].mxu0
    %v631 = vadd.f32 %v257, %v630
    %v632 = vpop.f32.mrb[0].mxu0
    %633 = vdwg.mxu0
    %v634 = vmax.f32 %v621, 0.0
    %v635 = vmax.f32 %v626, 0.0
    %v636 = vmax.f32 %v631, 0.0
    %v637 = vsel %vm171, %v634, 0.0
    %v638 = vsel %vm171, %v635, 0.0
    %v639 = vadd.f32 %v637, %v638
    %v640 = vsel %vm171, %v636, 0.0
    %v641 = vadd.f32 %v639, %v640
    %v642 = vrot.slane %v641, 4
    %v643 = vadd.f32 %v641, %v642
    %v644 = vrot.slane %v643, 2
    %v645 = vadd.f32 %v643, %v644
    %v646 = vrot.slane %v645, 1
    %v647 = vadd.f32 %v645, %v646
    %s648 = sld [smem:[#allocation4]]
    %v649 = vld [vmem:[%s8] sm:$0x1]
    %v650 = vmul.f32 %v344, %v649
    %vm651 = vcmask 253952
    %v652 = vsel %vm651, %v650, 0.0
    %653 = vadd.xlane.f32.xlu0 %v652
    %v654 = vpop.xlane.xlu0 %653
    %v655 = vld [vmem:[%s9] sm:$0x1]
    %v656 = vmul.f32 %v647, %v655
    %v657 = vsel %vm651, %v656, 0.0
    %658 = vadd.xlane.f32.xlu0 %v657
    %v659 = vpop.xlane.xlu0 %658
    %v660 = vadd.f32 %v654, %v659
    %v661 = vld [vmem:[#allocation2] sm:$0x1]
    %v662 = vstv %s648
    %v663 = vmul.f32 %v662, %v661
    %v664 = vadd.f32 %v660, %v663
    %v665 = vld [vmem:[#allocation3] sm:$0x1]
    %v666 = vadd.f32 %v664, %v665
    %vm667 = vcmask 0
    %668 = vst.msk [vmem:[#allocation5] sm:$0x1] %vm667, %v666
    // Predicated region
    $region54: #{dual_gcn_forward.1} parent=1 // pred_check
      _
    $region55: #{dual_gcn_forward.1} parent=1 // pred_check_branch
      %670 = sbr.rel (0) target = $region57
    $region56: #{dual_gcn_forward.1} parent=1 // pred_region
      %s672 = ssub.s32 16, 16
      %673 = vsyncadd [#allocation6], %s672
      %s675 = sshll.u32 [#allocation5], 4
      %s676 = int_to_ptr.vmem [resolvable:$true] %s675
      %678 = dma.vmem_to_hbm [thread:$0]  %s676, 16, %s13, [#allocation6]
    $region57: #{dual_gcn_forward.1} parent=1 // pred_fallthru
      _
    // Predicated region
    $region58: #{dual_gcn_forward.1} parent=1 // pred_check
      _
    $region59: #{dual_gcn_forward.1} parent=1 // pred_check_branch
      %680 = sbr.rel (0) target = $region61
    $region60: #{dual_gcn_forward.1} parent=1 // pred_region
      %681 = dma.done [#allocation6], 16
    $region61: #{dual_gcn_forward.1} parent=1 // pred_fallthru
      _
    %682 = vsyncpa [#allocation6], 1

</llo_original>
